<compile_context>
chip_gen: v7x
topology: tpu7x:2x2x1
jax: 0.10.0
libtpu: 0.0.40
codegen_flags: <defaults>
</compile_context>

<pallas_src>
import functools

import jax
import jax.numpy as jnp
import numpy as np
from jax.experimental import pallas as pl
from jax.experimental.pallas import tpu as pltpu


def _round_up(x, m):
    return ((x + m - 1) // m) * m


# ----------------------------------------------------------------------------
# Kernels
# ----------------------------------------------------------------------------
def _matmul_bias_fused_kernel(p_ref, w_ref, b_ref, o_ref):
    """Single-K-block fast path: o = p @ w + b, no scratch, no phases."""
    o_ref[...] = (
        jnp.dot(p_ref[...], w_ref[...], preferred_element_type=jnp.float32)
        + b_ref[...]
    ).astype(o_ref.dtype)


def _matmul_bias_acc_kernel(p_ref, w_ref, b_ref, o_ref, acc_ref):
    """K-tiled matmul with the bias folded into the accumulator init.

    Grid = (M_tiles, N_tiles, K_tiles); K is the reduction ("arbitrary") axis.
    """
    k = pl.program_id(2)

    @pl.when(k == 0)
    def _():
        acc_ref[...] = jnp.broadcast_to(b_ref[...], acc_ref.shape).astype(
            jnp.float32
        )

    acc_ref[...] += jnp.dot(
        p_ref[...], w_ref[...], preferred_element_type=jnp.float32
    )

    @pl.when(k == pl.num_programs(2) - 1)
    def _():
        o_ref[...] = acc_ref[...].astype(o_ref.dtype)


# ----------------------------------------------------------------------------
# Tile selection
# ----------------------------------------------------------------------------
_VMEM_BUDGET = 20 * 1024 * 1024   # leave headroom under the 32 MiB scoped limit


def _vmem_bytes(tm, tn, tk, multi_k):
    # Double-buffered input/output blocks (bf16 in, f32 out) + f32 accumulator
    # scratch when K is tiled.
    b = 2 * (tm * tk * 2 + tk * tn * 2 + tm * tn * 4 + tn * 4)
    if multi_k:
        b += tm * tn * 4
    return b


def _choose_tiles(M, K, E_pad, max_fused_k):
    tm = 512 if M >= 512 else _round_up(M, 8)

    tn_small = next(t for t in (512, 256, 128) if E_pad % t == 0)
    # Keep the whole (K, E) weight resident when E is modest: single N block.
    tn = E_pad if E_pad <= 1024 else tn_small

    K_eff = _round_up(K, 128)          # lane-aligned; no copy when K%128==0
    if K_eff <= max_fused_k:
        tk = K_eff                     # single K step -> fused fast path
    else:
        tk_cap = max(128, min(1024, max_fused_k))
        tk = next(t for t in (1024, 512, 256, 128)
                  if t <= tk_cap and K_eff % t == 0)
    multi_k = K_eff != tk

    # Safety net: shrink tiles if a config would overflow VMEM (ViT-sized
    # configs never hit this: worst case ~16 MiB).
    while _vmem_bytes(tm, tn, tk, multi_k) > _VMEM_BUDGET:
        if tn > tn_small:
            tn = tn_small
        elif tm > 128:
            tm = max(128, _round_up(tm // 2, 8))
        else:
            break
    return tm, tn, tk, K_eff, multi_k


# ----------------------------------------------------------------------------
# pallas_call wrapper
# ----------------------------------------------------------------------------
def _matmul_bias(patches, w_flat_t, bias2d, *, tm, tn, tk, out_dtype):
    """patches: (M, K) bf16, w_flat_t: (K, E) bf16, bias2d: (1, E) f32.

    All dims are pre-padded so M % tm == 0, E % tn == 0, K % tk == 0.
    Returns (M, E) in out_dtype.
    """
    M, K = patches.shape
    _, E = w_flat_t.shape
    nk = K // tk

    if nk == 1:
        # Fused fast path: no accumulator scratch, no init/finalize phases.
        # With an (i, j) grid (j innermost) the patches block index is
        # constant across j and the weight block across i, so Pallas fetches
        # each exactly once.
        return pl.pallas_call(
            _matmul_bias_fused_kernel,
            out_shape=jax.ShapeDtypeStruct((M, E), out_dtype),
            grid_spec=pltpu.PrefetchScalarGridSpec(
                num_scalar_prefetch=0,
                grid=(M // tm, E // tn),
                in_specs=[
                    pl.BlockSpec((tm, K), lambda i, j: (i, 0)),
                    pl.BlockSpec((K, tn), lambda i, j: (0, j)),
                    pl.BlockSpec((1, tn), lambda i, j: (0, j)),
                ],
                out_specs=pl.BlockSpec((tm, tn), lambda i, j: (i, j)),
            ),
            compiler_params=pltpu.CompilerParams(
                dimension_semantics=("parallel", "parallel"),
                vmem_limit_bytes=32 * 1024 * 1024,
            ),
        )(patches, w_flat_t, bias2d)

    return pl.pallas_call(
        _matmul_bias_acc_kernel,
        out_shape=jax.ShapeDtypeStruct((M, E), out_dtype),
        grid_spec=pltpu.PrefetchScalarGridSpec(
            num_scalar_prefetch=0,
            grid=(M // tm, E // tn, nk),
            in_specs=[
                pl.BlockSpec((tm, tk), lambda i, j, k: (i, k)),
                pl.BlockSpec((tk, tn), lambda i, j, k: (k, j)),
                pl.BlockSpec((1, tn), lambda i, j, k: (0, j)),
            ],
            out_specs=pl.BlockSpec((tm, tn), lambda i, j, k: (i, j)),
            scratch_shapes=[pltpu.VMEM((tm, tn), jnp.float32)],
        ),
        compiler_params=pltpu.CompilerParams(
            dimension_semantics=("parallel", "parallel", "arbitrary"),
            vmem_limit_bytes=32 * 1024 * 1024,
        ),
    )(patches, w_flat_t, bias2d)


# ----------------------------------------------------------------------------
# PatchEmbed forward
# ----------------------------------------------------------------------------
def patch_embed_forward(x, weight, bias, *, tubelet_size, patch_size,
                        max_fused_k=2048):
    """Pallas implementation of PatchEmbed.forward.

    x:      (B, C, T, H, W)      float32
    weight: (E, C, tub, ph, pw)  (same layout as nn.Conv3d.weight)
    bias:   (E,)
    returns (B, num_patches, E) float32, num_patches = (T//tub)*(H//ph)*(W//pw)
    """
    B, C, T, H, W = x.shape
    E = weight.shape[0]
    tub = tubelet_size
    ph, pw = patch_size

    Tg, Hg, Wg = T // tub, H // ph, W // pw
    num_patches = Tg * Hg * Wg
    K = C * tub * ph * pw
    M = B * num_patches

    # --- glue: non-overlapping patch extraction (layout plumbing only). ---
    # The bf16 cast fuses into the transpose, so the materialized patches
    # array moves half the bytes.
    # TODO(synk): pull the patch extraction into the kernel (manual DMA of
    # contiguous (C, tub, ph, W) slabs + in-VMEM reshuffle) to skip the HBM
    # round-trip of the transposed patches array entirely.
    x_bf = x.astype(jnp.bfloat16)
    xp = x_bf.reshape(B, C, Tg, tub, Hg, ph, Wg, pw)
    # -> (B, T', H', W', C, tub, ph, pw): flattened patch order matches the
    # Conv3d weight flattening order (c, dt, dh, dw).
    xp = xp.transpose(0, 2, 4, 6, 1, 3, 5, 7)
    patches = xp.reshape(M, K)

    w_flat_t = weight.astype(jnp.bfloat16).reshape(E, K).T  # (K, E)
    bias2d = bias.astype(jnp.float32).reshape(1, E)

    # --- pad to MXU/lane-friendly sizes (zeros; sliced off afterwards). ---
    E_pad = _round_up(E, 128)          # lane-dense output stores
    tm, tn, tk, K_eff, _ = _choose_tiles(M, K, E_pad, max_fused_k)
    M_pad = _round_up(M, tm)

    if (M_pad, K_eff) != (M, K):
        patches = jnp.pad(patches, ((0, M_pad - M), (0, K_eff - K)))
    if (K_eff, E_pad) != (K, E):
        w_flat_t = jnp.pad(w_flat_t, ((0, K_eff - K), (0, E_pad - E)))
    if E_pad != E:
        bias2d = jnp.pad(bias2d, ((0, 0), (0, E_pad - E)))

    # --- Pallas hot path: (M_pad, K_eff) @ (K_eff, E_pad) + bias ---
    out = _matmul_bias(
        patches, w_flat_t, bias2d, tm=tm, tn=tn, tk=tk, out_dtype=jnp.float32
    )

    out = out[:M, :E]
    # norm_layer=None -> Identity; flatten=True -> (B, N, E)
    return out.reshape(B, num_patches, E)


# ----------------------------------------------------------------------------
# Self-test
# ----------------------------------------------------------------------------
if __name__ == "__main__":
    # Small config consistent with the module:
    #   img_size=16, patch_size=8, num_frames=2, tubelet_size=1,
    #   in_chans=4, embed_dim=32
    B, C, T, H, W = 2, 4, 2, 16, 16
    tub, ph, pw = 1, 8, 8
    E = 32

    key = jax.random.PRNGKey(0)
    kx, kw, kb = jax.random.split(key, 3)
    x = jax.random.normal(kx, (B, C, T, H, W), dtype=jnp.float32)
    weight = jax.random.normal(kw, (E, C, tub, ph, pw), dtype=jnp.float32) * 0.02
    bias = jax.random.normal(kb, (E,), dtype=jnp.float32) * 0.02

    # Reference: true strided 3D conv via XLA, then flatten(2).transpose(1,2).
    # Inputs rounded through bf16 to mirror the kernel's bf16 operands
    # (accumulation is f32 in both paths).
    x_ref = x.astype(jnp.bfloat16).astype(jnp.float32)
    w_ref = weight.astype(jnp.bfloat16).astype(jnp.float32)
    ref = jax.lax.conv_general_dilated(
        x_ref, w_ref,
        window_strides=(tub, ph, pw),
        padding="VALID",
        dimension_numbers=("NCDHW", "OIDHW", "NCDHW"),
    ) + bias.reshape(1, E, 1, 1, 1)
    ref = ref.reshape(B, E, -1).transpose(0, 2, 1)

    # 1) Default config: single-K-block fused fast path.
    fwd = functools.partial(
        patch_embed_forward, tubelet_size=tub, patch_size=(ph, pw)
    )
    out = jax.block_until_ready(jax.jit(fwd)(x, weight, bias))
    assert out.shape == (B, (T // tub) * (H // ph) * (W // pw), E)
    np.testing.assert_allclose(np.asarray(out), np.asarray(ref),
                               rtol=1e-2, atol=1e-2)

    # 2) Force the K-tiled accumulator path on the same data (max_fused_k < K).
    fwd_acc = functools.partial(
        patch_embed_forward, tubelet_size=tub, patch_size=(ph, pw),
        max_fused_k=128,
    )
    out_acc = jax.block_until_ready(jax.jit(fwd_acc)(x, weight, bias))
    np.testing.assert_allclose(np.asarray(out_acc), np.asarray(ref),
                               rtol=1e-2, atol=1e-2)

    print("KERNEL_OK")
</pallas_src>

<mosaic_0001>
module attributes {stable_mosaic.version = 11 : i64} {
  func.func @_matmul_bias_fused_kernel(%arg0: i32, %arg1: i32, %arg2: memref<16x256xbf16, #tpu.memory_space<vmem>>, %arg3: memref<256x128xbf16, #tpu.memory_space<vmem>>, %arg4: memref<1x128xf32, #tpu.memory_space<vmem>>, %arg5: memref<16x128xf32, #tpu.memory_space<vmem>>) attributes {dimension_semantics = [#tpu.dimension_semantics<parallel>, #tpu.dimension_semantics<parallel>], iteration_bounds = array<i64: 1, 1>, scalar_prefetch = 0 : i64, scratch_operands = 0 : i64, tpu.core_type = #tpu.core_type<tc>, window_params = [{transform_indices = @transform_0, window_bounds = array<i64: 16, 256>}, {transform_indices = @transform_1, window_bounds = array<i64: 256, 128>}, {transform_indices = @transform_2, window_bounds = array<i64: 1, 128>}, {transform_indices = @transform_3, window_bounds = array<i64: 16, 128>}]} {
    %c0 = arith.constant 0 : index
    %c0_0 = arith.constant 0 : index
    %0 = vector.load %arg2[%c0, %c0_0] : memref<16x256xbf16, #tpu.memory_space<vmem>>, vector<16x256xbf16>
    %c0_1 = arith.constant 0 : index
    %c0_2 = arith.constant 0 : index
    %1 = vector.load %arg3[%c0_1, %c0_2] : memref<256x128xbf16, #tpu.memory_space<vmem>>, vector<256x128xbf16>
    %cst = arith.constant dense<0.000000e+00> : vector<16x128xf32>
    %2 = tpu.matmul %0, %1, %cst {dimension_numbers = #tpu.dot_dimension_numbers<[1], [0], [0], [1], [0, 0, 1, 1], [], []>} : vector<16x256xbf16>, vector<256x128xbf16>, vector<16x128xf32> -> vector<16x128xf32>
    %c0_3 = arith.constant 0 : index
    %c0_4 = arith.constant 0 : index
    %3 = vector.load %arg4[%c0_3, %c0_4] : memref<1x128xf32, #tpu.memory_space<vmem>>, vector<1x128xf32>
    %4 = vector.broadcast %3 : vector<1x128xf32> to vector<16x128xf32>
    %5 = arith.addf %2, %4 : vector<16x128xf32>
    %c0_5 = arith.constant 0 : index
    %c0_6 = arith.constant 0 : index
    %6 = vector.load %arg5[%c0_5, %c0_6] : memref<16x128xf32, #tpu.memory_space<vmem>>, vector<16x128xf32>
    tpu.vector_store %arg5[%c0_5, %c0_6], %5 {strides = array<i32>} : memref<16x128xf32, #tpu.memory_space<vmem>>, vector<16x128xf32>,
    return
  }
  func.func @transform_0(%arg0: i32, %arg1: i32) -> (i32, i32) {
    %c0_i32 = arith.constant 0 : i32
    %c0_i32_0 = arith.constant 0 : i32
    return %arg0, %c0_i32 : i32, i32
  }
  func.func @transform_1(%arg0: i32, %arg1: i32) -> (i32, i32) {
    %c0_i32 = arith.constant 0 : i32
    %c0_i32_0 = arith.constant 0 : i32
    return %c0_i32, %arg1 : i32, i32
  }
  func.func @transform_2(%arg0: i32, %arg1: i32) -> (i32, i32) {
    %c0_i32 = arith.constant 0 : i32
    %c0_i32_0 = arith.constant 0 : i32
    return %c0_i32, %arg1 : i32, i32
  }
  func.func @transform_3(%arg0: i32, %arg1: i32) -> (i32, i32) {
    %c0_i32 = arith.constant 0 : i32
    return %arg0, %arg1 : i32, i32
  }
}

</mosaic_0001>

<llo_original>
// kernel: patch_embed_forward.1
$region0: #{patch_embed_forward.1}
  #allocation0 [shape = 'u32[]', space=smem, size = 0x4, offset = 0x4, fixed_abs, tag = 'smem constant byte address 0x4 - core index']
  #allocation1 [shape = 'u32[144,128]{1,0:T(1,128)}', space=vmem, size = 0x12000, scoped, tag = 'internal scratch']
  %s0 = inlined_call_operand.vmem [shape: bf16[16,256], index: 0, kind: input, shape index: {}]
  %s1 = inlined_call_operand.vmem [shape: bf16[256,128], index: 1, kind: input, shape index: {}]
  %s2 = inlined_call_operand.vmem [shape: f32[1,128], index: 2, kind: input, shape index: {}]
  %s3 = inlined_call_operand.vmem [shape: f32[16,128], index: 3, kind: output, shape index: {}]
  %s4 = sld [smem:[#allocation0]]
  $region22: #{patch_embed_forward.1} parent=0
    _
  %s6 = ssub.s32 1, %s4
  %s7 = scalar_select 0, %s6, %s4
  // Predicated region
  $region2: #{patch_embed_forward.1} parent=0 // pred_check
    _
  $region3: #{patch_embed_forward.1} parent=0 // pred_check_branch
    %9 = sbr.rel (0) target = $region5
  $region4: #{patch_embed_forward.1} parent=0 // pred_region
    _
  $region5: #{patch_embed_forward.1} parent=0 // pred_fallthru
    _
  // Predicated region
  $region6: #{patch_embed_forward.1} parent=0 // pred_check
    _
  $region7: #{patch_embed_forward.1} parent=0 // pred_check_branch
    %11 = sbr.rel (0) target = $region9
  $region8: #{patch_embed_forward.1} parent=0 // pred_region
    _
  $region9: #{patch_embed_forward.1} parent=0 // pred_fallthru
    _
  // Predicated region
  $region10: #{patch_embed_forward.1} parent=0 // pred_check
    _
  $region11: #{patch_embed_forward.1} parent=0 // pred_check_branch
    %13 = sbr.rel (0) target = $region13
  $region12: #{patch_embed_forward.1} parent=0 // pred_region
    _
  $region13: #{patch_embed_forward.1} parent=0 // pred_fallthru
    _
  %v15 = vld [vmem:[%s0] sm:$0xff]
  %v16 = vld [vmem:[%s0 + $0x8] sm:$0xff]
  %v17 = vld [vmem:[%s1] sm:$0xf]
  %v18 = vld [vmem:[%s1 + $0x4] sm:$0xf]
  %v19 = vld [vmem:[%s1 + $0x8] sm:$0xf]
  %v20 = vld [vmem:[%s1 + $0xc] sm:$0xf]
  %v21 = vld [vmem:[%s1 + $0x10] sm:$0xf]
  %v22 = vld [vmem:[%s1 + $0x14] sm:$0xf]
  %v23 = vld [vmem:[%s1 + $0x18] sm:$0xf]
  %v24 = vld [vmem:[%s1 + $0x1c] sm:$0xf]
  %v25 = vld [vmem:[%s1 + $0x20] sm:$0xf]
  %v26 = vld [vmem:[%s1 + $0x24] sm:$0xf]
  %v27 = vld [vmem:[%s1 + $0x28] sm:$0xf]
  %v28 = vld [vmem:[%s1 + $0x2c] sm:$0xf]
  %v29 = vld [vmem:[%s1 + $0x30] sm:$0xf]
  %v30 = vld [vmem:[%s1 + $0x34] sm:$0xf]
  %v31 = vld [vmem:[%s1 + $0x38] sm:$0xf]
  %v32 = vld [vmem:[%s1 + $0x3c] sm:$0xf]
  %v33 = vld [vmem:[%s1 + $0x40] sm:$0xf]
  %v34 = vld [vmem:[%s1 + $0x44] sm:$0xf]
  %v35 = vld [vmem:[%s1 + $0x48] sm:$0xf]
  %v36 = vld [vmem:[%s1 + $0x4c] sm:$0xf]
  %v37 = vld [vmem:[%s1 + $0x50] sm:$0xf]
  %v38 = vld [vmem:[%s1 + $0x54] sm:$0xf]
  %v39 = vld [vmem:[%s1 + $0x58] sm:$0xf]
  %v40 = vld [vmem:[%s1 + $0x5c] sm:$0xf]
  %v41 = vld [vmem:[%s1 + $0x60] sm:$0xf]
  %v42 = vld [vmem:[%s1 + $0x64] sm:$0xf]
  %v43 = vld [vmem:[%s1 + $0x68] sm:$0xf]
  %v44 = vld [vmem:[%s1 + $0x6c] sm:$0xf]
  %v45 = vld [vmem:[%s1 + $0x70] sm:$0xf]
  %v46 = vld [vmem:[%s1 + $0x74] sm:$0xf]
  %v47 = vld [vmem:[%s1 + $0x78] sm:$0xf]
  %v48 = vld [vmem:[%s1 + $0x7c] sm:$0xf]
  %v49 = vld [vmem:[%s2] sm:$0x1]
  %v51 = vlaneseq
  %v52 = vshrl.u32 %v51, 7
  %v53 = vsub.s32 0, %v52
  %v54 = vrot.slane %v49, %v53
  %v58 = vunpack.c.l.b16 %v15
  %v59 = vunpack.c.h.b16 %v15
  %v60 = vunpack.c.l.b16 %v16
  %v61 = vunpack.c.h.b16 %v16
  %v62 = vpack.c.b16 %v60, %v58
  %v63 = vpack.c.b16 %v61, %v59
  %v98 = vunpack.c.l.b16 %v17
  %v99 = vunpack.c.l.b16 %v18
  %v100 = vunpack.c.l.b16 %v19
  %v101 = vunpack.c.l.b16 %v20
  %v102 = vunpack.c.l.b16 %v21
  %v103 = vunpack.c.l.b16 %v22
  %v104 = vunpack.c.l.b16 %v23
  %v105 = vunpack.c.l.b16 %v24
  %v106 = vunpack.c.l.b16 %v25
  %v107 = vunpack.c.l.b16 %v26
  %v108 = vunpack.c.l.b16 %v27
  %v109 = vunpack.c.l.b16 %v28
  %v110 = vunpack.c.l.b16 %v29
  %v111 = vunpack.c.l.b16 %v30
  %v112 = vunpack.c.l.b16 %v31
  %v113 = vunpack.c.l.b16 %v32
  %v114 = vunpack.c.l.b16 %v33
  %v115 = vunpack.c.l.b16 %v34
  %v116 = vunpack.c.l.b16 %v35
  %v117 = vunpack.c.l.b16 %v36
  %v118 = vunpack.c.l.b16 %v37
  %v119 = vunpack.c.l.b16 %v38
  %v120 = vunpack.c.l.b16 %v39
  %v121 = vunpack.c.l.b16 %v40
  %v122 = vunpack.c.l.b16 %v41
  %v123 = vunpack.c.l.b16 %v42
  %v124 = vunpack.c.l.b16 %v43
  %v125 = vunpack.c.l.b16 %v44
  %v126 = vunpack.c.l.b16 %v45
  %v127 = vunpack.c.l.b16 %v46
  %v128 = vunpack.c.l.b16 %v47
  %v129 = vunpack.c.l.b16 %v48
  %v130 = vpack.c.b16 %v99, %v98
  %v131 = vpack.c.b16 %v101, %v100
  %v132 = vpack.c.b16 %v103, %v102
  %v133 = vpack.c.b16 %v105, %v104
  %v134 = vpack.c.b16 %v107, %v106
  %v135 = vpack.c.b16 %v109, %v108
  %v136 = vpack.c.b16 %v111, %v110
  %v137 = vpack.c.b16 %v113, %v112
  %v138 = vpack.c.b16 %v115, %v114
  %v139 = vpack.c.b16 %v117, %v116
  %v140 = vpack.c.b16 %v119, %v118
  %v141 = vpack.c.b16 %v121, %v120
  %v142 = vpack.c.b16 %v123, %v122
  %v143 = vpack.c.b16 %v125, %v124
  %v144 = vpack.c.b16 %v127, %v126
  %v145 = vpack.c.b16 %v129, %v128
  %162 = vmatprep.subr.bf16.mxu0 0
  %163 = vmatpush1.bf16.msra.mxu0 %v130
  %164 = vmatprep.subr.bf16.mxu0 0
  %165 = vmatpush1.bf16.msra.mxu0 %v131
  %166 = vmatprep.subr.bf16.mxu0 0
  %167 = vmatpush1.bf16.msra.mxu0 %v132
  %168 = vmatprep.subr.bf16.mxu0 0
  %169 = vmatpush1.bf16.msra.mxu0 %v133
  %170 = vmatprep.subr.bf16.mxu0 0
  %171 = vmatpush1.bf16.msra.mxu0 %v134
  %172 = vmatprep.subr.bf16.mxu0 0
  %173 = vmatpush1.bf16.msra.mxu0 %v135
  %174 = vmatprep.subr.bf16.mxu0 0
  %175 = vmatpush1.bf16.msra.mxu0 %v136
  %176 = vmatprep.subr.bf16.mxu0 0
  %177 = vmatpush1.bf16.msra.mxu0 %v137
  %178 = vmatprep.subr.bf16.mxu0 0
  %179 = vmatpush1.bf16.msra.mxu0 %v138
  %180 = vmatprep.subr.bf16.mxu0 0
  %181 = vmatpush1.bf16.msra.mxu0 %v139
  %182 = vmatprep.subr.bf16.mxu0 0
  %183 = vmatpush1.bf16.msra.mxu0 %v140
  %184 = vmatprep.subr.bf16.mxu0 0
  %185 = vmatpush1.bf16.msra.mxu0 %v141
  %186 = vmatprep.subr.bf16.mxu0 0
  %187 = vmatpush1.bf16.msra.mxu0 %v142
  %188 = vmatprep.subr.bf16.mxu0 0
  %189 = vmatpush1.bf16.msra.mxu0 %v143
  %190 = vmatprep.subr.bf16.mxu0 0
  %191 = vmatpush1.bf16.msra.mxu0 %v144
  %192 = vmatprep.subr.bf16.mxu0 0
  %193 = vmatpush1.bf16.msra.mxu0 %v145
  %194 = vmatprep.mubr.bf16.mxu0 %v63
  %195 = vmatmul.mubr.bf16.gmra.mrb[0].mxu0 %v62
  %v196 = vpop.f32.mrb[0].mxu0
  %v197 = vadd.f32 %v54, %v196
  %v198 = vpop.f32.mrb[0].mxu0
  %v199 = vpop.f32.mrb[0].mxu0
  %v200 = vadd.f32 %v54, %v199
  %v201 = vpop.f32.mrb[0].mxu0
  %202 = vdwg.mxu0
  %203 = vst [vmem:[%s3] sm:$0xff] %v197
  %204 = vst [vmem:[%s3 + $0x8] sm:$0xff] %v200
  // Predicated region
  $region14: #{patch_embed_forward.1} parent=0 // pred_check
    _
  $region15: #{patch_embed_forward.1} parent=0 // pred_check_branch
    %206 = sbr.rel (0) target = $region17
  $region16: #{patch_embed_forward.1} parent=0 // pred_region
    _
  $region17: #{patch_embed_forward.1} parent=0 // pred_fallthru
    _
  // Predicated region
  $region18: #{patch_embed_forward.1} parent=0 // pred_check
    _
  $region19: #{patch_embed_forward.1} parent=0 // pred_check_branch
    %208 = sbr.rel (0) target = $region21
  $region20: #{patch_embed_forward.1} parent=0 // pred_region
    _
  $region21: #{patch_embed_forward.1} parent=0 // pred_fallthru
    _

</llo_original>
